<compile_context>
chip_gen: v7x
topology: tpu7x:2x2x1
jax: 0.10.0
libtpu: 0.0.40
codegen_flags: <defaults>
</compile_context>

<pallas_src>
import math
import numpy as np

import jax
import jax.numpy as jnp
from jax.experimental import pallas as pl
from jax.experimental.pallas import tpu as pltpu


class PositionalEncoding:
    """JAX/Pallas port of the PyTorch PositionalEncoding module."""

    def __init__(self, pe_embed: str, *, block_b: int = 512,
                 out_dtype=jnp.float32, min_pallas_batch: int | None = None):
        self.pe_embed = pe_embed.lower()
        self.block_b = int(block_b)                 # lane tile: multiple of 128
        self.out_dtype = out_dtype
        self.min_pallas_batch = (self.block_b if min_pallas_batch is None
                                 else int(min_pallas_batch))

        if self.pe_embed == "none":
            self.embed_length = 1
            return

        lbase, levels = [float(x) for x in self.pe_embed.split("_")]
        self.lbase = lbase
        self.levels = int(levels)
        self.embed_length = 2 * self.levels

        # Per-row constants (row r of the output tile):
        #   scale[2i] = scale[2i+1] = lbase**i * pi     phase[2i] = 0, phase[2i+1] = pi/2
        # so  out[r, :] = sin(pos * scale[r] + phase[r])  gives [sin_i, cos_i] interleaved.
        lv = np.arange(self.levels, dtype=np.float64)
        self._scale = np.repeat(self.lbase ** lv * math.pi, 2).astype(np.float32)[:, None]
        self._phase = np.tile(np.array([0.0, math.pi / 2.0]), self.levels).astype(
            np.float32)[:, None]
        # Device copies passed as explicit pallas_call operands (NOT captured in the kernel).
        self._scale_dev = jnp.asarray(self._scale)
        self._phase_dev = jnp.asarray(self._phase)

        # Traced once per padded batch shape.
        self._pallas_fn = jax.jit(self._pallas_forward)

    # ------------------------------------------------------------------ Pallas path
    def _pallas_forward(self, pos: jax.Array, scale: jax.Array,
                        phase: jax.Array) -> jax.Array:
        """pos: (B,) f32  ->  (2L, B_pad) lane-dense interleaved encoding."""
        two_l = self.embed_length
        bb = self.block_b
        B = pos.shape[0]
        B_pad = ((B + bb - 1) // bb) * bb
        if B_pad != B:
            pos = jnp.pad(pos, (0, B_pad - B))       # tail sliced off by the caller

        def kernel(scale_ref, phase_ref, pos_ref, out_ref):
            # scale_ref/phase_ref: (2L, 1) f32.  pos_ref: (1, bb) f32, batch on lanes.
            # out_ref: (2L, bb).  Broadcast (1,bb)*(2L,1)+(2L,1) -> (2L,bb); one dense
            # jnp.sin over the whole tile = exactly 2L transcendentals per position
            # (the EUP floor), already in interleaved row order.
            t = pos_ref[...] * scale_ref[...] + phase_ref[...]
            out_ref[...] = jnp.sin(t).astype(out_ref.dtype)

        return pl.pallas_call(
            kernel,
            out_shape=jax.ShapeDtypeStruct((two_l, B_pad), self.out_dtype),
            grid=(B_pad // bb,),
            in_specs=[
                pl.BlockSpec((two_l, 1), lambda i: (0, 0)),   # scale (full array)
                pl.BlockSpec((two_l, 1), lambda i: (0, 0)),   # phase (full array)
                pl.BlockSpec((1, bb), lambda i: (0, i)),      # positions, lane-dense
            ],
            out_specs=pl.BlockSpec((two_l, bb), lambda i: (0, i)),
            compiler_params=pltpu.CompilerParams(
                dimension_semantics=("parallel",)),   # shards across v7x's 2 TCs
        )(scale, phase, pos.reshape(1, B_pad))

    # ------------------------------------------------------------------ public API
    def __call__(self, pos: jax.Array, batch_major: bool = True) -> jax.Array:
        if self.pe_embed == "none":
            return jnp.asarray(pos)[:, None]

        pos = jnp.asarray(pos, jnp.float32).reshape(-1)
        B = pos.shape[0]

        if B < self.min_pallas_batch:
            # Tiny batch: plain jnp is cheaper than pallas_call fixed overhead.
            out_lb = jnp.sin(pos[None, :] * self._scale + self._phase).astype(self.out_dtype)
        else:
            out_lb = self._pallas_fn(pos, self._scale_dev, self._phase_dev)  # (2L, B_pad)
            if out_lb.shape[1] != B:
                out_lb = out_lb[:, :B]               # drop padded tail

        if batch_major:
            # PyTorch layout (B, 2L).  Single final transpose; consumers that accept the
            # lane-dense (2L, B) layout can pass batch_major=False and skip it.
            return out_lb.T
        return out_lb


if __name__ == "__main__":
    key = jax.random.PRNGKey(0)
    k1, k2, k3 = jax.random.split(key, 3)

    lbase, levels = 1.25, 4
    pe = PositionalEncoding(f"{lbase}_{levels}")     # embed_length = 8

    def reference(p):
        cols = []
        for i in range(levels):
            t = p * (lbase ** i) * math.pi
            cols += [jnp.sin(t), jnp.cos(t)]
        return jnp.stack(cols, axis=1)

    # 1) Pallas path, exact multiple of the block size.
    pos_a = jax.random.uniform(k1, (1024,), dtype=jnp.float32)
    out_a = jax.block_until_ready(pe(pos_a))
    assert out_a.shape == (1024, pe.embed_length)
    assert jnp.allclose(out_a, reference(pos_a), atol=1e-4, rtol=1e-4)

    # 2) Pallas path with padding (B not a multiple of the lane tile).
    pos_b = jax.random.uniform(k2, (777,), dtype=jnp.float32)
    out_b = jax.block_until_ready(pe(pos_b))
    assert out_b.shape == (777, pe.embed_length)
    assert jnp.allclose(out_b, reference(pos_b), atol=1e-4, rtol=1e-4)

    # 2b) Lane-dense (2L, B) layout handed directly to a consumer.
    out_b_lb = jax.block_until_ready(pe(pos_b, batch_major=False))
    assert out_b_lb.shape == (pe.embed_length, 777)
    assert jnp.allclose(out_b_lb.T, out_b, atol=1e-6, rtol=1e-6)

    # 3) Tiny batch: plain-jnp fallback (Pallas overhead not worth it).
    pos_c = jax.random.uniform(k3, (8,), dtype=jnp.float32)
    out_c = jax.block_until_ready(pe(pos_c))
    assert out_c.shape == (8, pe.embed_length)
    assert jnp.allclose(out_c, reference(pos_c), atol=1e-4, rtol=1e-4)

    # 4) 'none' branch: pure layout glue, no kernel.
    pe_none = PositionalEncoding("none")
    out_none = jax.block_until_ready(pe_none(pos_c))
    assert out_none.shape == (8, 1)

    print("KERNEL_OK")
</pallas_src>

<mosaic_0001>
module attributes {stable_mosaic.version = 11 : i64} {
  func.func @kernel(%arg0: i32, %arg1: memref<8x1xf32, #tpu.memory_space<vmem>>, %arg2: memref<8x1xf32, #tpu.memory_space<vmem>>, %arg3: memref<1x512xf32, #tpu.memory_space<vmem>>, %arg4: memref<8x512xf32, #tpu.memory_space<vmem>>) attributes {dimension_semantics = [#tpu.dimension_semantics<parallel>], iteration_bounds = array<i64: 2>, scalar_prefetch = 0 : i64, scratch_operands = 0 : i64, tpu.core_type = #tpu.core_type<tc>, window_params = [{pipeline_mode = #tpu.pipeline_mode<synchronous>, transform_indices = @transform_0, window_bounds = array<i64: 8, 1>}, {pipeline_mode = #tpu.pipeline_mode<synchronous>, transform_indices = @transform_1, window_bounds = array<i64: 8, 1>}, {transform_indices = @transform_2, window_bounds = array<i64: 1, 512>}, {transform_indices = @transform_3, window_bounds = array<i64: 8, 512>}]} {
    %c0 = arith.constant 0 : index
    %c0_0 = arith.constant 0 : index
    %0 = vector.load %arg3[%c0, %c0_0] : memref<1x512xf32, #tpu.memory_space<vmem>>, vector<1x512xf32>
    %c0_1 = arith.constant 0 : index
    %c0_2 = arith.constant 0 : index
    %1 = vector.load %arg1[%c0_1, %c0_2] : memref<8x1xf32, #tpu.memory_space<vmem>>, vector<8x1xf32>
    %2 = vector.broadcast %0 : vector<1x512xf32> to vector<8x512xf32>
    %3 = vector.broadcast %1 : vector<8x1xf32> to vector<8x512xf32>
    %4 = arith.mulf %2, %3 : vector<8x512xf32>
    %c0_3 = arith.constant 0 : index
    %c0_4 = arith.constant 0 : index
    %5 = vector.load %arg2[%c0_3, %c0_4] : memref<8x1xf32, #tpu.memory_space<vmem>>, vector<8x1xf32>
    %6 = vector.broadcast %5 : vector<8x1xf32> to vector<8x512xf32>
    %7 = arith.addf %4, %6 : vector<8x512xf32>
    %8 = math.sin %7 : vector<8x512xf32>
    %c0_5 = arith.constant 0 : index
    %c0_6 = arith.constant 0 : index
    %9 = vector.load %arg4[%c0_5, %c0_6] : memref<8x512xf32, #tpu.memory_space<vmem>>, vector<8x512xf32>
    tpu.vector_store %arg4[%c0_5, %c0_6], %8 {strides = array<i32>} : memref<8x512xf32, #tpu.memory_space<vmem>>, vector<8x512xf32>,
    return
  }
  func.func @transform_0(%arg0: i32) -> (i32, i32) {
    %c0_i32 = arith.constant 0 : i32
    %c0_i32_0 = arith.constant 0 : i32
    %c0_i32_1 = arith.constant 0 : i32
    return %c0_i32, %c0_i32_0 : i32, i32
  }
  func.func @transform_1(%arg0: i32) -> (i32, i32) {
    %c0_i32 = arith.constant 0 : i32
    %c0_i32_0 = arith.constant 0 : i32
    %c0_i32_1 = arith.constant 0 : i32
    return %c0_i32, %c0_i32_0 : i32, i32
  }
  func.func @transform_2(%arg0: i32) -> (i32, i32) {
    %c0_i32 = arith.constant 0 : i32
    %c0_i32_0 = arith.constant 0 : i32
    return %c0_i32, %arg0 : i32, i32
  }
  func.func @transform_3(%arg0: i32) -> (i32, i32) {
    %c0_i32 = arith.constant 0 : i32
    %c0_i32_0 = arith.constant 0 : i32
    return %c0_i32, %arg0 : i32, i32
  }
}

</mosaic_0001>

<llo_original>
// kernel: _pallas_forward.1
$region0: #{_pallas_forward.1}
  #allocation0 [shape = 'u32[]', space=smem, size = 0x4, offset = 0x4, fixed_abs, tag = 'smem constant byte address 0x4 - core index']
  #allocation1 [shape = 'u32[144,128]{1,0:T(1,128)}', space=vmem, size = 0x12000, scoped, tag = 'internal scratch']
  %s0 = inlined_call_operand.vmem [shape: f32[8,1], index: 0, kind: input, shape index: {}]
  %s1 = inlined_call_operand.vmem [shape: f32[8,1], index: 1, kind: input, shape index: {}]
  %s2 = inlined_call_operand.vmem [shape: f32[1,1024], index: 2, kind: input, shape index: {}]
  %s3 = inlined_call_operand.hbm [shape: f32[8,1024], index: 3, kind: output, shape index: {}]
  %s4 = sld [smem:[#allocation0]]
  $region45: #{_pallas_forward.1} parent=0
    _
  %s6 = ssub.s32 1, %s4
  %s7 = scalar_select 0, %s6, %s4
  $region1: #{_pallas_forward.1} parent=0
    #allocation2 [shape = 'u8[32768]{0}', space=vmem, size = 0x8000, scoped, tag = 'output window, operand 0']
    #allocation3 [shape = 's32[2]{0}', space=sflag, size = 0x8, scoped, tag = 'scoped memory for _pallas_forward.1']
    %8 = vsyncpa [#allocation3], 0
    %s9 = scalar_lea.sflag [#allocation3], 1
    %10 = vsyncpa %s9, 0
    loop: start=0, step=1, limit=4
    $region2: #{_pallas_forward.1} parent=1 // loop_pre_header
      _
    $region3: #{_pallas_forward.1} parent=1 // loop_header
      %s12 = sphi 0, %s16
      %p13 = scmp.ge.s32.totalorder %s12, 4
      %s20 = sphi 0, %s20
      %s22 = sphi 0, %s20
      %s23 = sphi 0, %s22
      %s37 = sphi 0, %s23
      %s41 = sphi 0, %s41
      %s43 = sphi 0, %s41
      %s44 = sphi 0, %s43
      %s58 = sphi 0, %s44
      %s64 = sphi 0, %s66
      %s67 = sphi 0, %s64
      %s68 = sphi 0, %s67
      %s84 = sphi 0, %s68
      %s90 = sphi 0, %s92
      %s93 = sphi 0, %s90
      %s94 = sphi 0, %s93
      %s110 = sphi 0, %s94
    $region4: #{_pallas_forward.1} parent=1 // loop_header_branch
      %15 = sbr.rel (%p13) target = $region8
    $region5: #{_pallas_forward.1} parent=1 // loop_body
      %s17 = ssub.s32 %s12, 1
      %s18 = ssub.s32 %s12, 2
      %s19 = sadd.s32 %s12, 1
      %s21 = sadd.s32 %s20, 1
      %p24 = scmp.eq.s32.totalorder %s12, 1
      %p25 = scmp.ne.s32.totalorder %s20, %s22
      %p26 = scmp.eq.s32.totalorder %s12, 0
      %p27 = por %p25, %p26
      %p28 = scmp.ne.s32.totalorder %s20, %s22
      %p29 = scmp.eq.s32.totalorder %s17, 1
      %p30 = por %p28, %p29
      %p31 = scmp.ne.s32.totalorder %s22, %s23
      %p32 = scmp.eq.s32.totalorder %s17, 0
      %p33 = por %p31, %p32
      %p34 = scmp.ne.s32.totalorder %s22, %s23
      %p35 = scmp.eq.s32.totalorder %s18, 1
      %p36 = por %p34, %p35
      %p38 = scmp.ne.s32.totalorder %s23, %s37
      %p39 = scmp.eq.s32.totalorder %s18, 0
      %p40 = por %p38, %p39
      %s42 = sadd.s32 %s41, 1
      %p45 = scmp.eq.s32.totalorder %s12, 1
      %p46 = scmp.ne.s32.totalorder %s41, %s43
      %p47 = scmp.eq.s32.totalorder %s12, 0
      %p48 = por %p46, %p47
      %p49 = scmp.ne.s32.totalorder %s41, %s43
      %p50 = scmp.eq.s32.totalorder %s17, 1
      %p51 = por %p49, %p50
      %p52 = scmp.ne.s32.totalorder %s43, %s44
      %p53 = scmp.eq.s32.totalorder %s17, 0
      %p54 = por %p52, %p53
      %p55 = scmp.ne.s32.totalorder %s43, %s44
      %p56 = scmp.eq.s32.totalorder %s18, 1
      %p57 = por %p55, %p56
      %p59 = scmp.ne.s32.totalorder %s44, %s58
      %p60 = scmp.eq.s32.totalorder %s18, 0
      %p61 = por %p59, %p60
      %s62 = ssub.s32 %s12, %s19
      %p63 = scmp.eq.s32.totalorder %s62, 0
      %s65 = sadd.s32 %s64, 1
      %s66 = scalar_select %p63, %s64, %s65
      %p69 = pneg %p63
      %p70 = scmp.eq.s32.totalorder %s12, 1
      %p71 = por %p69, %p70
      %p72 = scmp.ne.s32.totalorder %s64, %s67
      %p73 = scmp.eq.s32.totalorder %s12, 0
      %p74 = por %p72, %p73
      %p75 = scmp.ne.s32.totalorder %s64, %s67
      %p76 = scmp.eq.s32.totalorder %s17, 1
      %p77 = por %p75, %p76
      %p78 = scmp.ne.s32.totalorder %s67, %s68
      %p79 = scmp.eq.s32.totalorder %s17, 0
      %p80 = por %p78, %p79
      %p81 = scmp.ne.s32.totalorder %s67, %s68
      %p82 = scmp.eq.s32.totalorder %s18, 1
      %p83 = por %p81, %p82
      %p85 = scmp.ne.s32.totalorder %s68, %s84
      %p86 = scmp.eq.s32.totalorder %s18, 0
      %p87 = por %p85, %p86
      %s88 = ssub.s32 %s12, %s19
      %p89 = scmp.eq.s32.totalorder %s88, 0
      %s91 = sadd.s32 %s90, 1
      %s92 = scalar_select %p89, %s90, %s91
      %p95 = pneg %p89
      %p96 = scmp.eq.s32.totalorder %s12, 1
      %p97 = por %p95, %p96
      %p98 = scmp.ne.s32.totalorder %s90, %s93
      %p99 = scmp.eq.s32.totalorder %s12, 0
      %p100 = por %p98, %p99
      %p101 = scmp.ne.s32.totalorder %s90, %s93
      %p102 = scmp.eq.s32.totalorder %s17, 1
      %p103 = por %p101, %p102
      %p104 = scmp.ne.s32.totalorder %s93, %s94
      %p105 = scmp.eq.s32.totalorder %s17, 0
      %p106 = por %p104, %p105
      %p107 = scmp.ne.s32.totalorder %s93, %s94
      %p108 = scmp.eq.s32.totalorder %s18, 1
      %p109 = por %p107, %p108
      %p111 = scmp.ne.s32.totalorder %s94, %s110
      %p112 = scmp.eq.s32.totalorder %s18, 0
      %p113 = por %p111, %p112
      %p114 = scmp.le.s32.totalorder 1, %s12
      %p115 = scmp.lt.s32.totalorder %s12, 3
      %p116 = pnand %p114, %p115
      %p117 = pneg %p116
      // Predicated region
      $region9: #{_pallas_forward.1} parent=5 // pred_check
        _
      $region10: #{_pallas_forward.1} parent=5 // pred_check_branch
        %119 = sbr.rel (%p116) target = $region12
      $region11: #{_pallas_forward.1} parent=5 // pred_region
        %s120 = ssub.s32 %s12, 1
        // Predicated region
        $region13: #{_pallas_forward.1} parent=11 // pred_check
          %p121 = pneg %p33
        $region14: #{_pallas_forward.1} parent=11 // pred_check_branch
          %123 = sbr.rel (%p121) target = $region16
        $region15: #{_pallas_forward.1} parent=11 // pred_region
          _
        $region16: #{_pallas_forward.1} parent=11 // pred_fallthru
          _
        // Predicated region
        $region17: #{_pallas_forward.1} parent=11 // pred_check
          %p124 = pneg %p54
        $region18: #{_pallas_forward.1} parent=11 // pred_check_branch
          %126 = sbr.rel (%p124) target = $region20
        $region19: #{_pallas_forward.1} parent=11 // pred_region
          _
        $region20: #{_pallas_forward.1} parent=11 // pred_fallthru
          _
      $region12: #{_pallas_forward.1} parent=5 // pred_fallthru
        _
      %p127 = scmp.lt.s32.totalorder %s12, 2
      // Predicated region
      $region21: #{_pallas_forward.1} parent=5 // pred_check
        %p128 = pneg %p127
      $region22: #{_pallas_forward.1} parent=5 // pred_check_branch
        %130 = sbr.rel (%p128) target = $region24
      $region23: #{_pallas_forward.1} parent=5 // pred_region
        // Predicated region
        $region25: #{_pallas_forward.1} parent=23 // pred_check
          %p131 = pneg %p74
        $region26: #{_pallas_forward.1} parent=23 // pred_check_branch
          %133 = sbr.rel (%p131) target = $region28
        $region27: #{_pallas_forward.1} parent=23 // pred_region
          %s134 = smul.u32 4, %s12
          %p135 = scmp.lt.s32.totalorder %s134, 7
          %s136 = scalar_select %p135, %s134, 7
          %s137 = scalar_lea.vmem %s2, %s136
          %s138 = smul.u32 4, %s12
        $region28: #{_pallas_forward.1} parent=23 // pred_fallthru
          _
      $region24: #{_pallas_forward.1} parent=5 // pred_fallthru
        _
      %p139 = scmp.le.s32.totalorder 1, %s12
      %p140 = scmp.lt.s32.totalorder %s12, 3
      %p141 = pnand %p139, %p140
      %p142 = pneg %p141
      // Predicated region
      $region29: #{_pallas_forward.1} parent=5 // pred_check
        _
      $region30: #{_pallas_forward.1} parent=5 // pred_check_branch
        %144 = sbr.rel (%p141) target = $region32
      $region31: #{_pallas_forward.1} parent=5 // pred_region
        %s145 = ssub.s32 %s12, 1
        %p146 = pneg %p33
        %p147 = pneg %p30
        %p148 = pneg %p54
        %p149 = pneg %p51
        %s150 = smul.u32 4, %s17
        %p151 = scmp.lt.s32.totalorder %s150, 7
        %s152 = scalar_select %p151, %s150, 7
        %s153 = scalar_lea.vmem %s2, %s152
        %p154 = pneg %p80
        %p155 = pneg %p77
        %p156 = pneg %p106
        %p157 = pneg %p103
        %s158 = sand.u32 %s93, 1
        %s159 = scalar_lea.sflag [#allocation3], %s158
        %s160 = sand.u32 %s93, 1
        %s161 = smul.addr %s160, 32
        %s162 = scalar_lea.vmem [#allocation2], %s161
        %s163 = smul.u32 4, %s17
        %p164 = scmp.lt.s32.totalorder %s163, 7
        %s165 = scalar_select %p164, %s163, 7
        %s166 = scalar_lea.vmem %s2, %s165
        %s167 = smul.u32 4, %s17
        %s168 = smul.u32 4, %s17
        %v169 = vld [vmem:[%s166] sm:$0xf]
        %v170 = vld [vmem:[%s0] sm:$0xff]
        %v172 = vlaneseq
        %v173 = vshrl.u32 %v172, 7
        %v174 = vsub.s32 0, %v173
        %v175 = vrot.slane %v169, %v174
        %v176 = vlaneseq
        %v177 = vshrl.u32 %v176, 7
        %v178 = vsub.s32 1, %v177
        %v179 = vrot.slane %v169, %v178
        %v180 = vlaneseq
        %v181 = vshrl.u32 %v180, 7
        %v182 = vsub.s32 2, %v181
        %v183 = vrot.slane %v169, %v182
        %v184 = vlaneseq
        %v185 = vshrl.u32 %v184, 7
        %v186 = vsub.s32 3, %v185
        %v187 = vrot.slane %v169, %v186
        %193 = vset.pattern.permute.xlu0 0
        %194 = vperm.xlu0 %193, %v170
        %v195 = vpop.permute.xlu0 %194
        %v197 = vmul.f32 %v175, %v195
        %v198 = vmul.f32 %v179, %v195
        %v199 = vmul.f32 %v183, %v195
        %v200 = vmul.f32 %v187, %v195
        %v201 = vld [vmem:[%s1] sm:$0xff]
        %203 = vset.pattern.permute.xlu0 0
        %204 = vperm.xlu0 %203, %v201
        %v205 = vpop.permute.xlu0 %204
        %v207 = vadd.f32 %v197, %v205
        %v208 = vadd.f32 %v198, %v205
        %v209 = vadd.f32 %v199, %v205
        %v210 = vadd.f32 %v200, %v205
        %v211 = vand.u32 2147483647, %v207
        %vm212 = vcmp.le.f32.partialorder %v211, 0.7853982
        %vm213 = vcmp.lt.s32.totalorder %v207, 0
        %v214 = vand.u32 %v207, 2139095040
        %v215 = vshrl.u32 %v214, 23
        %v216 = vsub.s32 %v215, 127
        %v217 = vand.u32 2147483647, %v207
        %v218 = vand.u32 %v217, 8388607
        %v219 = vor.u32 %v218, 8388608
        %v220 = vsub.s32 0, %v219
        %v221 = vadd.s32 %v216, 1
        %vm222 = vcmp.gt.s32.totalorder %v221, 0
        %v223 = vsel %vm222, %v221, 0
        %v224 = vshrl.u32 %v223, 5
        %v225 = vand.u32 %v223, 31
        %v226 = vsub.s32 32, %v225
        %v227 = vshrl.u32 683565275, %v226
        %v228 = vshll.u32 683565275, %v225
        %v229 = vshrl.u32 2475754826, %v226
        %v230 = vor.u32 %v228, %v229
        %v231 = vshll.u32 2475754826, %v225
        %v232 = vshrl.u32 2131351028, %v226
        %v233 = vor.u32 %v231, %v232
        %v234 = vshll.u32 2131351028, %v225
        %v235 = vshrl.u32 2102212464, %v226
        %v236 = vor.u32 %v234, %v235
        %v237 = vshll.u32 2102212464, %v225
        %v238 = vshrl.u32 920167782, %v226
        %v239 = vor.u32 %v237, %v238
        %v240 = vshll.u32 920167782, %v225
        %v241 = vshrl.u32 1326507024, %v226
        %v242 = vor.u32 %v240, %v241
        %vm243 = vcmp.lt.s32.totalorder %v224, 1
        %vm244 = vcmp.lt.s32.totalorder %v224, 2
        %vm245 = vcmp.lt.s32.totalorder %v224, 3
        %vm246 = vcmp.lt.s32.totalorder %v224, 4
        %v247 = vsel %vm243, %v227, %v230
        %v248 = vsel %vm246, %v236, 2102212464
        %v249 = vsel %vm245, %v233, %v248
        %v250 = vsel %vm244, %v247, %v249
        %v251 = vsel %vm243, %v230, %v233
        %v252 = vsel %vm246, %v239, 920167782
        %v253 = vsel %vm245, %v236, %v252
        %v254 = vsel %vm244, %v251, %v253
        %v255 = vsel %vm243, %v233, %v236
        %v256 = vsel %vm246, %v242, 1326507024
        %v257 = vsel %vm245, %v239, %v256
        %v258 = vsel %vm244, %v255, %v257
        %v259 = vshll.u32 %v219, 8
        %v260 = vmul.u32.u64.compose %v259, %v258
        %v261 = vextract.low.u32 %v260
        %v262 = vextract.high.u32 %v260
        %v263 = vmul.u32.u64.compose %v259, %v254
        %v264 = vextract.low.u32 %v263
        %v265 = vextract.high.u32 %v263
        %v266 = vmul.u32 %v259, %v250
        %v267 = vadd.s32 %v262, %v264
        %vm268 = vc.u32 %v262, %v264
        %v269 = vadd.s32 %v265, 1
        %v270 = vsel %vm268, %v269, %v265
        %v271 = vadd.s32 %v266, %v270
        %v272 = vadd.s32 %v271, 536870912
        %v273 = vshrl.u32 %v272, 30
        %v274 = vshll.u32 %v273, 30
        %v275 = vsub.s32 %v271, %v274
        %vm276 = vcmp.lt.s32.totalorder %v275, 0
        %v277 = vsub.s32 0, %v275
        %v278 = vsel %vm276, %v277, %v275
        %v279 = vclz %v278
        %v280 = vsub.s32 %v279, 2
        %vm281 = vcmp.gt.s32.totalorder 0, %v280
        %v282 = vsel %vm281, 0, %v280
        %v283 = vsub.s32 32, %v282
        %v284 = vshll.u32 %v275, %v282
        %v285 = vshrl.u32 %v267, %v283
        %v286 = vor.u32 %v284, %v285
        %v287 = vsub.s32 4294967266, %v282
        %v288 = vadd.s32 %v287, 127
        %v289 = vshll.u32 %v288, 23
        %v290 = vor.u32 4788187, %v289
        %v291 = vand.u32 2147483647, %v290
        %v293 = vcvt.s32.f32 %v286
        %v294 = vmul.f32 %v293, %v291
        %v295 = vxor.u32 %v294, 2147483648
        %v296 = vsel %vm213, %v295, %v294
        %v297 = vsub.s32 4, %v273
        %v298 = vsel %vm213, %v297, %v273
        %v299 = vsel %vm212, %v207, %v296
        %v300 = vsel %vm212, 0, %v298
        %v301 = vcosq.f32.pop %v299
        %v302 = vsinq.f32.pop %v299
        %vm303 = vweird.f32 %v207
        %v304 = vadd.s32 %v300, 3
        %v305 = vand.u32 %v304, 3
        %vm306 = vcmp.lt.s32.totalorder %v305, 2
        %vm307 = vcmp.eq.s32.totalorder %v305, 0
        %v308 = vxor.u32 %v302, 2147483648
        %v309 = vsel %vm307, %v301, %v308
        %vm310 = vcmp.eq.s32.totalorder %v305, 2
        %v311 = vxor.u32 %v301, 2147483648
        %v312 = vsel %vm310, %v311, %v302
        %v313 = vsel %vm306, %v309, %v312
        %v314 = vsel %vm303, nan, %v313
        %v315 = vand.u32 2147483647, %v208
        %vm316 = vcmp.le.f32.partialorder %v315, 0.7853982
        %vm317 = vcmp.lt.s32.totalorder %v208, 0
        %v318 = vand.u32 %v208, 2139095040
        %v319 = vshrl.u32 %v318, 23
        %v320 = vsub.s32 %v319, 127
        %v321 = vand.u32 2147483647, %v208
        %v322 = vand.u32 %v321, 8388607
        %v323 = vor.u32 %v322, 8388608
        %v324 = vsub.s32 0, %v323
        %v325 = vadd.s32 %v320, 1
        %vm326 = vcmp.gt.s32.totalorder %v325, 0
        %v327 = vsel %vm326, %v325, 0
        %v328 = vshrl.u32 %v327, 5
        %v329 = vand.u32 %v327, 31
        %v330 = vsub.s32 32, %v329
        %v331 = vshrl.u32 683565275, %v330
        %v332 = vshll.u32 683565275, %v329
        %v333 = vshrl.u32 2475754826, %v330
        %v334 = vor.u32 %v332, %v333
        %v335 = vshll.u32 2475754826, %v329
        %v336 = vshrl.u32 2131351028, %v330
        %v337 = vor.u32 %v335, %v336
        %v338 = vshll.u32 2131351028, %v329
        %v339 = vshrl.u32 2102212464, %v330
        %v340 = vor.u32 %v338, %v339
        %v341 = vshll.u32 2102212464, %v329
        %v342 = vshrl.u32 920167782, %v330
        %v343 = vor.u32 %v341, %v342
        %v344 = vshll.u32 920167782, %v329
        %v345 = vshrl.u32 1326507024, %v330
        %v346 = vor.u32 %v344, %v345
        %vm347 = vcmp.lt.s32.totalorder %v328, 1
        %vm348 = vcmp.lt.s32.totalorder %v328, 2
        %vm349 = vcmp.lt.s32.totalorder %v328, 3
        %vm350 = vcmp.lt.s32.totalorder %v328, 4
        %v351 = vsel %vm347, %v331, %v334
        %v352 = vsel %vm350, %v340, 2102212464
        %v353 = vsel %vm349, %v337, %v352
        %v354 = vsel %vm348, %v351, %v353
        %v355 = vsel %vm347, %v334, %v337
        %v356 = vsel %vm350, %v343, 920167782
        %v357 = vsel %vm349, %v340, %v356
        %v358 = vsel %vm348, %v355, %v357
        %v359 = vsel %vm347, %v337, %v340
        %v360 = vsel %vm350, %v346, 1326507024
        %v361 = vsel %vm349, %v343, %v360
        %v362 = vsel %vm348, %v359, %v361
        %v363 = vshll.u32 %v323, 8
        %v364 = vmul.u32.u64.compose %v363, %v362
        %v365 = vextract.low.u32 %v364
        %v366 = vextract.high.u32 %v364
        %v367 = vmul.u32.u64.compose %v363, %v358
        %v368 = vextract.low.u32 %v367
        %v369 = vextract.high.u32 %v367
        %v370 = vmul.u32 %v363, %v354
        %v371 = vadd.s32 %v366, %v368
        %vm372 = vc.u32 %v366, %v368
        %v373 = vadd.s32 %v369, 1
        %v374 = vsel %vm372, %v373, %v369
        %v375 = vadd.s32 %v370, %v374
        %v376 = vadd.s32 %v375, 536870912
        %v377 = vshrl.u32 %v376, 30
        %v378 = vshll.u32 %v377, 30
        %v379 = vsub.s32 %v375, %v378
        %vm380 = vcmp.lt.s32.totalorder %v379, 0
        %v381 = vsub.s32 0, %v379
        %v382 = vsel %vm380, %v381, %v379
        %v383 = vclz %v382
        %v384 = vsub.s32 %v383, 2
        %vm385 = vcmp.gt.s32.totalorder 0, %v384
        %v386 = vsel %vm385, 0, %v384
        %v387 = vsub.s32 32, %v386
        %v388 = vshll.u32 %v379, %v386
        %v389 = vshrl.u32 %v371, %v387
        %v390 = vor.u32 %v388, %v389
        %v391 = vsub.s32 4294967266, %v386
        %v392 = vadd.s32 %v391, 127
        %v393 = vshll.u32 %v392, 23
        %v394 = vor.u32 4788187, %v393
        %v395 = vand.u32 2147483647, %v394
        %v397 = vcvt.s32.f32 %v390
        %v398 = vmul.f32 %v397, %v395
        %v399 = vxor.u32 %v398, 2147483648
        %v400 = vsel %vm317, %v399, %v398
        %v401 = vsub.s32 4, %v377
        %v402 = vsel %vm317, %v401, %v377
        %v403 = vsel %vm316, %v208, %v400
        %v404 = vsel %vm316, 0, %v402
        %v405 = vcosq.f32.pop %v403
        %v406 = vsinq.f32.pop %v403
        %vm407 = vweird.f32 %v208
        %v408 = vadd.s32 %v404, 3
        %v409 = vand.u32 %v408, 3
        %vm410 = vcmp.lt.s32.totalorder %v409, 2
        %vm411 = vcmp.eq.s32.totalorder %v409, 0
        %v412 = vxor.u32 %v406, 2147483648
        %v413 = vsel %vm411, %v405, %v412
        %vm414 = vcmp.eq.s32.totalorder %v409, 2
        %v415 = vxor.u32 %v405, 2147483648
        %v416 = vsel %vm414, %v415, %v406
        %v417 = vsel %vm410, %v413, %v416
        %v418 = vsel %vm407, nan, %v417
        %v419 = vand.u32 2147483647, %v209
        %vm420 = vcmp.le.f32.partialorder %v419, 0.7853982
        %vm421 = vcmp.lt.s32.totalorder %v209, 0
        %v422 = vand.u32 %v209, 2139095040
        %v423 = vshrl.u32 %v422, 23
        %v424 = vsub.s32 %v423, 127
        %v425 = vand.u32 2147483647, %v209
        %v426 = vand.u32 %v425, 8388607
        %v427 = vor.u32 %v426, 8388608
        %v428 = vsub.s32 0, %v427
        %v429 = vadd.s32 %v424, 1
        %vm430 = vcmp.gt.s32.totalorder %v429, 0
        %v431 = vsel %vm430, %v429, 0
        %v432 = vshrl.u32 %v431, 5
        %v433 = vand.u32 %v431, 31
        %v434 = vsub.s32 32, %v433
        %v435 = vshrl.u32 683565275, %v434
        %v436 = vshll.u32 683565275, %v433
        %v437 = vshrl.u32 2475754826, %v434
        %v438 = vor.u32 %v436, %v437
        %v439 = vshll.u32 2475754826, %v433
        %v440 = vshrl.u32 2131351028, %v434
        %v441 = vor.u32 %v439, %v440
        %v442 = vshll.u32 2131351028, %v433
        %v443 = vshrl.u32 2102212464, %v434
        %v444 = vor.u32 %v442, %v443
        %v445 = vshll.u32 2102212464, %v433
        %v446 = vshrl.u32 920167782, %v434
        %v447 = vor.u32 %v445, %v446
        %v448 = vshll.u32 920167782, %v433
        %v449 = vshrl.u32 1326507024, %v434
        %v450 = vor.u32 %v448, %v449
        %vm451 = vcmp.lt.s32.totalorder %v432, 1
        %vm452 = vcmp.lt.s32.totalorder %v432, 2
        %vm453 = vcmp.lt.s32.totalorder %v432, 3
        %vm454 = vcmp.lt.s32.totalorder %v432, 4
        %v455 = vsel %vm451, %v435, %v438
        %v456 = vsel %vm454, %v444, 2102212464
        %v457 = vsel %vm453, %v441, %v456
        %v458 = vsel %vm452, %v455, %v457
        %v459 = vsel %vm451, %v438, %v441
        %v460 = vsel %vm454, %v447, 920167782
        %v461 = vsel %vm453, %v444, %v460
        %v462 = vsel %vm452, %v459, %v461
        %v463 = vsel %vm451, %v441, %v444
        %v464 = vsel %vm454, %v450, 1326507024
        %v465 = vsel %vm453, %v447, %v464
        %v466 = vsel %vm452, %v463, %v465
        %v467 = vshll.u32 %v427, 8
        %v468 = vmul.u32.u64.compose %v467, %v466
        %v469 = vextract.low.u32 %v468
        %v470 = vextract.high.u32 %v468
        %v471 = vmul.u32.u64.compose %v467, %v462
        %v472 = vextract.low.u32 %v471
        %v473 = vextract.high.u32 %v471
        %v474 = vmul.u32 %v467, %v458
        %v475 = vadd.s32 %v470, %v472
        %vm476 = vc.u32 %v470, %v472
        %v477 = vadd.s32 %v473, 1
        %v478 = vsel %vm476, %v477, %v473
        %v479 = vadd.s32 %v474, %v478
        %v480 = vadd.s32 %v479, 536870912
        %v481 = vshrl.u32 %v480, 30
        %v482 = vshll.u32 %v481, 30
        %v483 = vsub.s32 %v479, %v482
        %vm484 = vcmp.lt.s32.totalorder %v483, 0
        %v485 = vsub.s32 0, %v483
        %v486 = vsel %vm484, %v485, %v483
        %v487 = vclz %v486
        %v488 = vsub.s32 %v487, 2
        %vm489 = vcmp.gt.s32.totalorder 0, %v488
        %v490 = vsel %vm489, 0, %v488
        %v491 = vsub.s32 32, %v490
        %v492 = vshll.u32 %v483, %v490
        %v493 = vshrl.u32 %v475, %v491
        %v494 = vor.u32 %v492, %v493
        %v495 = vsub.s32 4294967266, %v490
        %v496 = vadd.s32 %v495, 127
        %v497 = vshll.u32 %v496, 23
        %v498 = vor.u32 4788187, %v497
        %v499 = vand.u32 2147483647, %v498
        %v501 = vcvt.s32.f32 %v494
        %v502 = vmul.f32 %v501, %v499
        %v503 = vxor.u32 %v502, 2147483648
        %v504 = vsel %vm421, %v503, %v502
        %v505 = vsub.s32 4, %v481
        %v506 = vsel %vm421, %v505, %v481
        %v507 = vsel %vm420, %v209, %v504
        %v508 = vsel %vm420, 0, %v506
        %v509 = vcosq.f32.pop %v507
        %v510 = vsinq.f32.pop %v507
        %vm511 = vweird.f32 %v209
        %v512 = vadd.s32 %v508, 3
        %v513 = vand.u32 %v512, 3
        %vm514 = vcmp.lt.s32.totalorder %v513, 2
        %vm515 = vcmp.eq.s32.totalorder %v513, 0
        %v516 = vxor.u32 %v510, 2147483648
        %v517 = vsel %vm515, %v509, %v516
        %vm518 = vcmp.eq.s32.totalorder %v513, 2
        %v519 = vxor.u32 %v509, 2147483648
        %v520 = vsel %vm518, %v519, %v510
        %v521 = vsel %vm514, %v517, %v520
        %v522 = vsel %vm511, nan, %v521
        %v523 = vand.u32 2147483647, %v210
        %vm524 = vcmp.le.f32.partialorder %v523, 0.7853982
        %vm525 = vcmp.lt.s32.totalorder %v210, 0
        %v526 = vand.u32 %v210, 2139095040
        %v527 = vshrl.u32 %v526, 23
        %v528 = vsub.s32 %v527, 127
        %v529 = vand.u32 2147483647, %v210
        %v530 = vand.u32 %v529, 8388607
        %v531 = vor.u32 %v530, 8388608
        %v532 = vsub.s32 0, %v531
        %v533 = vadd.s32 %v528, 1
        %vm534 = vcmp.gt.s32.totalorder %v533, 0
        %v535 = vsel %vm534, %v533, 0
        %v536 = vshrl.u32 %v535, 5
        %v537 = vand.u32 %v535, 31
        %v538 = vsub.s32 32, %v537
        %v539 = vshrl.u32 683565275, %v538
        %v540 = vshll.u32 683565275, %v537
        %v541 = vshrl.u32 2475754826, %v538
        %v542 = vor.u32 %v540, %v541
        %v543 = vshll.u32 2475754826, %v537
        %v544 = vshrl.u32 2131351028, %v538
        %v545 = vor.u32 %v543, %v544
        %v546 = vshll.u32 2131351028, %v537
        %v547 = vshrl.u32 2102212464, %v538
        %v548 = vor.u32 %v546, %v547
        %v549 = vshll.u32 2102212464, %v537
        %v550 = vshrl.u32 920167782, %v538
        %v551 = vor.u32 %v549, %v550
        %v552 = vshll.u32 920167782, %v537
        %v553 = vshrl.u32 1326507024, %v538
        %v554 = vor.u32 %v552, %v553
        %vm555 = vcmp.lt.s32.totalorder %v536, 1
        %vm556 = vcmp.lt.s32.totalorder %v536, 2
        %vm557 = vcmp.lt.s32.totalorder %v536, 3
        %vm558 = vcmp.lt.s32.totalorder %v536, 4
        %v559 = vsel %vm555, %v539, %v542
        %v560 = vsel %vm558, %v548, 2102212464
        %v561 = vsel %vm557, %v545, %v560
        %v562 = vsel %vm556, %v559, %v561
        %v563 = vsel %vm555, %v542, %v545
        %v564 = vsel %vm558, %v551, 920167782
        %v565 = vsel %vm557, %v548, %v564
        %v566 = vsel %vm556, %v563, %v565
        %v567 = vsel %vm555, %v545, %v548
        %v568 = vsel %vm558, %v554, 1326507024
        %v569 = vsel %vm557, %v551, %v568
        %v570 = vsel %vm556, %v567, %v569
        %v571 = vshll.u32 %v531, 8
        %v572 = vmul.u32.u64.compose %v571, %v570
        %v573 = vextract.low.u32 %v572
        %v574 = vextract.high.u32 %v572
        %v575 = vmul.u32.u64.compose %v571, %v566
        %v576 = vextract.low.u32 %v575
        %v577 = vextract.high.u32 %v575
        %v578 = vmul.u32 %v571, %v562
        %v579 = vadd.s32 %v574, %v576
        %vm580 = vc.u32 %v574, %v576
        %v581 = vadd.s32 %v577, 1
        %v582 = vsel %vm580, %v581, %v577
        %v583 = vadd.s32 %v578, %v582
        %v584 = vadd.s32 %v583, 536870912
        %v585 = vshrl.u32 %v584, 30
        %v586 = vshll.u32 %v585, 30
        %v587 = vsub.s32 %v583, %v586
        %vm588 = vcmp.lt.s32.totalorder %v587, 0
        %v589 = vsub.s32 0, %v587
        %v590 = vsel %vm588, %v589, %v587
        %v591 = vclz %v590
        %v592 = vsub.s32 %v591, 2
        %vm593 = vcmp.gt.s32.totalorder 0, %v592
        %v594 = vsel %vm593, 0, %v592
        %v595 = vsub.s32 32, %v594
        %v596 = vshll.u32 %v587, %v594
        %v597 = vshrl.u32 %v579, %v595
        %v598 = vor.u32 %v596, %v597
        %v599 = vsub.s32 4294967266, %v594
        %v600 = vadd.s32 %v599, 127
        %v601 = vshll.u32 %v600, 23
        %v602 = vor.u32 4788187, %v601
        %v603 = vand.u32 2147483647, %v602
        %v605 = vcvt.s32.f32 %v598
        %v606 = vmul.f32 %v605, %v603
        %v607 = vxor.u32 %v606, 2147483648
        %v608 = vsel %vm525, %v607, %v606
        %v609 = vsub.s32 4, %v585
        %v610 = vsel %vm525, %v609, %v585
        %v611 = vsel %vm524, %v210, %v608
        %v612 = vsel %vm524, 0, %v610
        %v613 = vcosq.f32.pop %v611
        %v614 = vsinq.f32.pop %v611
        %vm615 = vweird.f32 %v210
        %v616 = vadd.s32 %v612, 3
        %v617 = vand.u32 %v616, 3
        %vm618 = vcmp.lt.s32.totalorder %v617, 2
        %vm619 = vcmp.eq.s32.totalorder %v617, 0
        %v620 = vxor.u32 %v614, 2147483648
        %v621 = vsel %vm619, %v613, %v620
        %vm622 = vcmp.eq.s32.totalorder %v617, 2
        %v623 = vxor.u32 %v613, 2147483648
        %v624 = vsel %vm622, %v623, %v614
        %v625 = vsel %vm618, %v621, %v624
        %v626 = vsel %vm615, nan, %v625
        %627 = vst [vmem:[%s162] sm:$0xff] %v314
        %628 = vst [vmem:[%s162 + $0x8] sm:$0xff] %v418
        %629 = vst [vmem:[%s162 + $0x10] sm:$0xff] %v522
        %630 = vst [vmem:[%s162 + $0x18] sm:$0xff] %v626
        %s631 = sand.u32 %s93, 1
        %s632 = scalar_lea.sflag [#allocation3], %s631
        %s633 = sand.u32 %s93, 1
        %s634 = smul.addr %s633, 32
        %s635 = scalar_lea.vmem [#allocation2], %s634
        // Predicated region
        $region33: #{_pallas_forward.1} parent=31 // pred_check
          %p636 = pneg %p103
        $region34: #{_pallas_forward.1} parent=31 // pred_check_branch
          %638 = sbr.rel (%p636) target = $region36
        $region35: #{_pallas_forward.1} parent=31 // pred_region
          %s639 = smul.u32 4, %s17
          %s641 = ssub.s32 512, 512
          %642 = vsyncadd %s632, %s641
          %s643 = smul.addr %s639, 128
          %s644 = scalar_lea.hbm %s3, %s643
          %s646 = sshll.u32 %s635, 4
          %s647 = int_to_ptr.vmem [resolvable:$true] %s646
          %649 = dma.vmem_to_hbm [thread:$0]  %s647, 512, %s644, %s632
        $region36: #{_pallas_forward.1} parent=31 // pred_fallthru
          _
      $region32: #{_pallas_forward.1} parent=5 // pred_fallthru
        _
      %p650 = scmp.le.s32.totalorder 2, %s12
      // Predicated region
      $region37: #{_pallas_forward.1} parent=5 // pred_check
        %p651 = pneg %p650
      $region38: #{_pallas_forward.1} parent=5 // pred_check_branch
        %653 = sbr.rel (%p651) target = $region40
      $region39: #{_pallas_forward.1} parent=5 // pred_region
        %s654 = ssub.s32 %s12, 2
        // Predicated region
        $region41: #{_pallas_forward.1} parent=39 // pred_check
          %p655 = pneg %p109
        $region42: #{_pallas_forward.1} parent=39 // pred_check_branch
          %657 = sbr.rel (%p655) target = $region44
        $region43: #{_pallas_forward.1} parent=39 // pred_region
          %s658 = sand.u32 %s94, 1
          %s659 = scalar_lea.sflag [#allocation3], %s658
          %s660 = sand.u32 %s94, 1
          %s661 = smul.addr %s660, 32
          %s662 = scalar_lea.vmem [#allocation2], %s661
          %663 = dma.done %s659, 512
        $region44: #{_pallas_forward.1} parent=39 // pred_fallthru
          _
      $region40: #{_pallas_forward.1} parent=5 // pred_fallthru
        _
    $region6: #{_pallas_forward.1} parent=1 // loop_footer
      %s16 = sadd.s32 1, %s12
    $region7: #{_pallas_forward.1} parent=1 // loop_footer_branch
      %11 = sbr.rel target = $region3
    $region8: #{_pallas_forward.1} parent=1 // loop_exit
      _
    %664 = vsyncpa [#allocation3], 1
    %s665 = scalar_lea.sflag [#allocation3], 1
    %666 = vsyncpa %s665, 1

</llo_original>
